<compile_context>
chip_gen: v5e
topology: v5e:2x2
jax: 0.10.0
libtpu: 0.0.40
codegen_flags: <defaults>
</compile_context>

<pallas_src>
import jax
import jax.numpy as jnp
from jax import lax
from jax.experimental import pallas as pl
from jax.experimental.pallas import tpu as pltpu


def cbl_kernel(x_ref, w_ref, bias_ref, o_ref):
    """One batch element per grid step.

    x_ref:    (Hout, K*W*Cin)        im2row-packed, lane-dense input rows
    w_ref:    (K*W*Cin, Wout*Cout)   banded conv weights (BN scale folded in)
    bias_ref: (1, Wout*Cout)         BN bias tiled along lanes
    o_ref:    (Hout, Wout*Cout)      lane-dense output (unmasked 128-lane vst)
    """
    acc = jnp.dot(x_ref[...], w_ref[...],
                  preferred_element_type=jnp.float32)       # single deep MXU dot
    y = acc + bias_ref[...]                                  # folded BN bias (f32)
    o_ref[...] = jnp.maximum(y, 0.0).astype(o_ref.dtype)     # ReLU, dense store


def cbl_forward(x_nchw, weight_oihw, gamma, beta, run_mean, run_var,
                *, stride, eps=1e-5, compute_dtype=jnp.bfloat16):
    """Equivalent of CBL2.forward (eval-mode BN) for NCHW input.

    compute_dtype: bf16 by default (MXU peak on v5e/v6e/v7x); accumulation and
    the BN/ReLU epilogue stay in f32.
    """
    N, Cin, H, W = x_nchw.shape
    Cout, _, K, _ = weight_oihw.shape
    pad = int(K / 2)                       # matches the module's int(kernel_size/2)
    Hout = (H + 2 * pad - K) // stride + 1
    Wout = (W + 2 * pad - K) // stride + 1

    # ---- layout glue (plain JAX, one-time) ---------------------------------
    # TODO(synk): the NCHW<->NHWC transposes exist only to match the PyTorch
    # interface; an NHWC / packed-layout caller should skip them entirely.
    x = jnp.transpose(x_nchw, (0, 2, 3, 1))                  # NHWC
    x = jnp.pad(x, ((0, 0), (pad, pad), (0, 0), (0, 0)))     # pad H only
    # im2row over kh: X[n, ho, kh, wi, ci] = x_padH[n, ho*stride + kh, wi, ci]
    rows = [x[:, kh: kh + (Hout - 1) * stride + 1: stride] for kh in range(K)]
    x = jnp.stack(rows, axis=2)                               # (N, Hout, K, W, Cin)
    x = x.reshape(N, Hout, K * W * Cin).astype(compute_dtype)

    # ---- fold eval-mode BatchNorm into weights / bias ----------------------
    scale = (gamma / jnp.sqrt(run_var + eps)).astype(jnp.float32)
    bias = (beta - run_mean * scale).astype(jnp.float32)

    # ---- banded weights: fold kw taps, Cin contraction, the conv width
    #      shift structure (incl. width zero-padding) and the BN scale into a
    #      single (K*W*Cin, Wout*Cout) lane contraction ----------------------
    # TODO(synk): for large W, tile Wout (TW_out*Cout = 128 on v5e, 256 on
    # v6e/v7x) and build the band per tile so density and VMEM stay bounded.
    w = jnp.transpose(weight_oihw, (2, 3, 1, 0)).astype(jnp.float32)  # (K,K,Cin,Cout)
    w = w * scale[None, None, None, :]                                 # BN scale
    kw_idx = jnp.arange(K)[:, None, None]
    wi_idx = jnp.arange(W)[None, :, None]
    wo_idx = jnp.arange(Wout)[None, None, :]
    # banded[(kh, wi, ci), (wo, co)] = w[kh, kw, ci, co] iff wi == wo*s + kw - pad
    sel = (wi_idx == wo_idx * stride + kw_idx - pad).astype(jnp.float32)  # (K,W,Wout)
    w_banded = jnp.einsum('abcd,bie->aiced', w, sel)           # (K,W,Cin,Wout,Cout)
    w_banded = w_banded.reshape(K * W * Cin, Wout * Cout).astype(compute_dtype)

    bias_t = jnp.tile(bias, Wout).reshape(1, Wout * Cout)      # lane-tiled f32

    KWCin = K * W * Cin
    WoCo = Wout * Cout

    # Grid = (N,): 2 parallel steps at the test shape (one per v7x TensorCore),
    # each step a single (Hout, KWCin) @ (KWCin, WoCo) matmul.
    # TODO(synk): for N == 1, split Hout into 2 row tiles to keep v7x's second
    # TensorCore busy.
    out = pl.pallas_call(
        cbl_kernel,
        out_shape=jax.ShapeDtypeStruct((N, Hout, WoCo), x_nchw.dtype),
        grid_spec=pltpu.PrefetchScalarGridSpec(
            num_scalar_prefetch=0,
            grid=(N,),
            in_specs=[
                pl.BlockSpec((None, Hout, KWCin), lambda n: (n, 0, 0)),
                pl.BlockSpec((KWCin, WoCo), lambda n: (0, 0)),
                pl.BlockSpec((1, WoCo), lambda n: (0, 0)),
            ],
            out_specs=pl.BlockSpec((None, Hout, WoCo), lambda n: (n, 0, 0)),
        ),
        compiler_params=pltpu.CompilerParams(
            dimension_semantics=("parallel",),
            vmem_limit_bytes=32 * 1024 * 1024),
    )(x, w_banded, bias_t)

    out = out.reshape(N, Hout, Wout, Cout)
    return jnp.transpose(out, (0, 3, 1, 2))                    # back to NCHW


def reference_cbl(x_nchw, weight_oihw, gamma, beta, run_mean, run_var,
                  *, stride, eps=1e-5):
    Cout = weight_oihw.shape[0]
    K = weight_oihw.shape[2]
    pad = int(K / 2)
    y = lax.conv_general_dilated(
        x_nchw, weight_oihw,
        window_strides=(stride, stride),
        padding=[(pad, pad), (pad, pad)],
        dimension_numbers=("NCHW", "OIHW", "NCHW"))
    scale = gamma / jnp.sqrt(run_var + eps)
    bias = beta - run_mean * scale
    y = y * scale.reshape(1, Cout, 1, 1) + bias.reshape(1, Cout, 1, 1)
    return jnp.maximum(y, 0.0)


if __name__ == "__main__":
    # CBL2(in_channels=4, out_channels=8, kernel_size=3, stride=1)
    N, Cin, H, W = 2, 4, 16, 16
    Cout, K, stride = 8, 3, 1

    key = jax.random.PRNGKey(0)
    kx, kw, kg, kb, km, kv = jax.random.split(key, 6)

    x = jax.random.normal(kx, (N, Cin, H, W), dtype=jnp.float32)
    weight = jax.random.normal(kw, (Cout, Cin, K, K), dtype=jnp.float32) * 0.1
    gamma = 1.0 + 0.1 * jax.random.normal(kg, (Cout,), dtype=jnp.float32)
    beta = 0.1 * jax.random.normal(kb, (Cout,), dtype=jnp.float32)
    run_mean = 0.1 * jax.random.normal(km, (Cout,), dtype=jnp.float32)
    run_var = jnp.abs(jax.random.normal(kv, (Cout,), dtype=jnp.float32)) + 0.5

    out = cbl_forward(x, weight, gamma, beta, run_mean, run_var, stride=stride)
    out = jax.block_until_ready(out)

    ref = reference_cbl(x, weight, gamma, beta, run_mean, run_var, stride=stride)
    assert out.shape == ref.shape, (out.shape, ref.shape)
    # bf16 compute (f32 accumulation) -> loosened tolerance per the review.
    assert jnp.allclose(out, ref, atol=2e-2, rtol=2e-2), \
        f"max abs err {jnp.max(jnp.abs(out - ref))}"

    print("KERNEL_OK")
</pallas_src>

<mosaic_0001>
module attributes {stable_mosaic.version = 11 : i64} {
  func.func @cbl_kernel(%arg0: i32, %arg1: memref<1x16x192xbf16, #tpu.memory_space<vmem>>, %arg2: memref<192x128xbf16, #tpu.memory_space<vmem>>, %arg3: memref<1x128xf32, #tpu.memory_space<vmem>>, %arg4: memref<1x16x128xf32, #tpu.memory_space<vmem>>) attributes {dimension_semantics = [#tpu.dimension_semantics<parallel>], iteration_bounds = array<i64: 2>, scalar_prefetch = 0 : i64, scratch_operands = 0 : i64, tpu.core_type = #tpu.core_type<tc>, window_params = [{transform_indices = @transform_0, window_bounds = array<i64: 1, 16, 192>}, {pipeline_mode = #tpu.pipeline_mode<synchronous>, transform_indices = @transform_1, window_bounds = array<i64: 192, 128>}, {pipeline_mode = #tpu.pipeline_mode<synchronous>, transform_indices = @transform_2, window_bounds = array<i64: 1, 128>}, {transform_indices = @transform_3, window_bounds = array<i64: 1, 16, 128>}]} {
    %c0 = arith.constant 0 : index
    %c0_0 = arith.constant 0 : index
    %c0_1 = arith.constant 0 : index
    %0 = vector.load %arg1[%c0, %c0_0, %c0_1] : memref<1x16x192xbf16, #tpu.memory_space<vmem>>, vector<1x16x192xbf16>
    %1 = vector.shape_cast %0 : vector<1x16x192xbf16> to vector<16x192xbf16>
    %c0_2 = arith.constant 0 : index
    %c0_3 = arith.constant 0 : index
    %2 = vector.load %arg2[%c0_2, %c0_3] : memref<192x128xbf16, #tpu.memory_space<vmem>>, vector<192x128xbf16>
    %cst = arith.constant dense<0.000000e+00> : vector<16x128xf32>
    %3 = tpu.matmul %1, %2, %cst {dimension_numbers = #tpu.dot_dimension_numbers<[1], [0], [0], [1], [0, 0, 1, 1], [], []>} : vector<16x192xbf16>, vector<192x128xbf16>, vector<16x128xf32> -> vector<16x128xf32>
    %c0_4 = arith.constant 0 : index
    %c0_5 = arith.constant 0 : index
    %4 = vector.load %arg3[%c0_4, %c0_5] : memref<1x128xf32, #tpu.memory_space<vmem>>, vector<1x128xf32>
    %5 = vector.broadcast %4 : vector<1x128xf32> to vector<16x128xf32>
    %6 = arith.addf %3, %5 : vector<16x128xf32>
    %cst_6 = arith.constant 0.000000e+00 : f32
    %7 = vector.broadcast %cst_6 : f32 to vector<16x128xf32>
    %8 = arith.maximumf %6, %7 : vector<16x128xf32>
    %c0_7 = arith.constant 0 : index
    %c0_8 = arith.constant 0 : index
    %c0_9 = arith.constant 0 : index
    %9 = vector.load %arg4[%c0_7, %c0_8, %c0_9] : memref<1x16x128xf32, #tpu.memory_space<vmem>>, vector<1x16x128xf32>
    %10 = vector.shape_cast %9 : vector<1x16x128xf32> to vector<16x128xf32>
    %11 = vector.shape_cast %8 : vector<16x128xf32> to vector<1x16x128xf32>
    tpu.vector_store %arg4[%c0_7, %c0_8, %c0_9], %11 {strides = array<i32>} : memref<1x16x128xf32, #tpu.memory_space<vmem>>, vector<1x16x128xf32>,
    return
  }
  func.func @transform_0(%arg0: i32) -> (i32, i32, i32) {
    %c0_i32 = arith.constant 0 : i32
    %c0_i32_0 = arith.constant 0 : i32
    %c0_i32_1 = arith.constant 0 : i32
    return %arg0, %c0_i32, %c0_i32_0 : i32, i32, i32
  }
  func.func @transform_1(%arg0: i32) -> (i32, i32) {
    %c0_i32 = arith.constant 0 : i32
    %c0_i32_0 = arith.constant 0 : i32
    %c0_i32_1 = arith.constant 0 : i32
    return %c0_i32, %c0_i32_0 : i32, i32
  }
  func.func @transform_2(%arg0: i32) -> (i32, i32) {
    %c0_i32 = arith.constant 0 : i32
    %c0_i32_0 = arith.constant 0 : i32
    %c0_i32_1 = arith.constant 0 : i32
    return %c0_i32, %c0_i32_0 : i32, i32
  }
  func.func @transform_3(%arg0: i32) -> (i32, i32, i32) {
    %c0_i32 = arith.constant 0 : i32
    %c0_i32_0 = arith.constant 0 : i32
    %c0_i32_1 = arith.constant 0 : i32
    return %arg0, %c0_i32, %c0_i32_0 : i32, i32, i32
  }
}

</mosaic_0001>

<llo_original>
// kernel: tpu_custom_call.1
$region0: #{tpu_custom_call.1}
  #allocation0 [shape = 'u32[]', space=smem, size = 0x4, offset = 0x4, fixed_abs, tag = 'smem constant byte address 0x4 - core index']
  #allocation1 [shape = 'u32[72,128]{1,0:T(1,128)}', space=vmem, size = 0x9000, scoped, tag = 'internal scratch']
  %s0 = inlined_call_operand.hbm [shape: bf16[2,16,192], index: 0, kind: input, shape index: {}]
  %s1 = inlined_call_operand.hbm [shape: bf16[192,128], index: 1, kind: input, shape index: {}]
  %s2 = inlined_call_operand.vmem [shape: f32[1,128], index: 2, kind: input, shape index: {}]
  %s3 = inlined_call_operand.hbm [shape: f32[2,16,128], index: 3, kind: output, shape index: {}]
  %s4 = sld [smem:[#allocation0]]
  $region53: #{tpu_custom_call.1} parent=0
    _
  %s6 = ssub.s32 1, %s4
  %s7 = scalar_select 0, %s6, %s4
  $region1: #{tpu_custom_call.1} parent=0
    #allocation2 [shape = 'u8[16384]{0}', space=vmem, size = 0x4000, scoped, tag = 'input window, operand 0']
    #allocation3 [shape = 's32[2]{0}', space=sflag, size = 0x8, scoped, tag = 'scoped memory for tpu_custom_call.1']
    #allocation4 [shape = 's32[2]{0}', space=sflag, size = 0x8, scoped, tag = 'scoped memory for tpu_custom_call.1']
    #allocation5 [shape = 'u8[49152]{0}', space=vmem, size = 0xc000, scoped, tag = 'input window, operand 1, single buffered']
    #allocation6 [shape = 's32[1]{0}', space=sflag, size = 0x4, scoped, tag = 'scoped memory for tpu_custom_call.1']
    #allocation7 [shape = 'u8[16384]{0}', space=vmem, size = 0x4000, scoped, tag = 'output window, operand 0']
    %8 = vsyncpa [#allocation3], 0
    %s9 = scalar_lea.sflag [#allocation3], 1
    %10 = vsyncpa %s9, 0
    %11 = vsyncpa [#allocation6], 0
    %12 = vsyncpa [#allocation4], 0
    %s13 = scalar_lea.sflag [#allocation4], 1
    %14 = vsyncpa %s13, 0
    loop: start=0, step=1, limit=4
    $region2: #{tpu_custom_call.1} parent=1 // loop_pre_header
      _
    $region3: #{tpu_custom_call.1} parent=1 // loop_header
      %s16 = sphi 0, %s20
      %p17 = scmp.ge.s32.totalorder %s16, 4
      %s26 = sphi 0, %s28
      %s29 = sphi 0, %s26
      %s30 = sphi 0, %s29
      %s46 = sphi 0, %s30
      %s50 = sphi 0, %s50
      %s52 = sphi 0, %s50
      %s53 = sphi 0, %s52
      %s67 = sphi 0, %s53
      %s71 = sphi 0, %s71
      %s73 = sphi 0, %s71
      %s74 = sphi 0, %s73
      %s88 = sphi 0, %s74
      %s94 = sphi 0, %s96
      %s97 = sphi 0, %s94
      %s98 = sphi 0, %s97
      %s114 = sphi 0, %s98
    $region4: #{tpu_custom_call.1} parent=1 // loop_header_branch
      %19 = sbr.rel (%p17) target = $region8
    $region5: #{tpu_custom_call.1} parent=1 // loop_body
      %s21 = ssub.s32 %s16, 1
      %s22 = ssub.s32 %s16, 2
      %s23 = sadd.s32 %s16, 1
      %s24 = ssub.s32 %s16, %s23
      %p25 = scmp.eq.s32.totalorder %s24, 0
      %s27 = sadd.s32 %s26, 1
      %s28 = scalar_select %p25, %s26, %s27
      %p31 = pneg %p25
      %p32 = scmp.eq.s32.totalorder %s16, 1
      %p33 = por %p31, %p32
      %p34 = scmp.ne.s32.totalorder %s26, %s29
      %p35 = scmp.eq.s32.totalorder %s16, 0
      %p36 = por %p34, %p35
      %p37 = scmp.ne.s32.totalorder %s26, %s29
      %p38 = scmp.eq.s32.totalorder %s21, 1
      %p39 = por %p37, %p38
      %p40 = scmp.ne.s32.totalorder %s29, %s30
      %p41 = scmp.eq.s32.totalorder %s21, 0
      %p42 = por %p40, %p41
      %p43 = scmp.ne.s32.totalorder %s29, %s30
      %p44 = scmp.eq.s32.totalorder %s22, 1
      %p45 = por %p43, %p44
      %p47 = scmp.ne.s32.totalorder %s30, %s46
      %p48 = scmp.eq.s32.totalorder %s22, 0
      %p49 = por %p47, %p48
      %s51 = sadd.s32 %s50, 1
      %p54 = scmp.eq.s32.totalorder %s16, 1
      %p55 = scmp.ne.s32.totalorder %s50, %s52
      %p56 = scmp.eq.s32.totalorder %s16, 0
      %p57 = por %p55, %p56
      %p58 = scmp.ne.s32.totalorder %s50, %s52
      %p59 = scmp.eq.s32.totalorder %s21, 1
      %p60 = por %p58, %p59
      %p61 = scmp.ne.s32.totalorder %s52, %s53
      %p62 = scmp.eq.s32.totalorder %s21, 0
      %p63 = por %p61, %p62
      %p64 = scmp.ne.s32.totalorder %s52, %s53
      %p65 = scmp.eq.s32.totalorder %s22, 1
      %p66 = por %p64, %p65
      %p68 = scmp.ne.s32.totalorder %s53, %s67
      %p69 = scmp.eq.s32.totalorder %s22, 0
      %p70 = por %p68, %p69
      %s72 = sadd.s32 %s71, 1
      %p75 = scmp.eq.s32.totalorder %s16, 1
      %p76 = scmp.ne.s32.totalorder %s71, %s73
      %p77 = scmp.eq.s32.totalorder %s16, 0
      %p78 = por %p76, %p77
      %p79 = scmp.ne.s32.totalorder %s71, %s73
      %p80 = scmp.eq.s32.totalorder %s21, 1
      %p81 = por %p79, %p80
      %p82 = scmp.ne.s32.totalorder %s73, %s74
      %p83 = scmp.eq.s32.totalorder %s21, 0
      %p84 = por %p82, %p83
      %p85 = scmp.ne.s32.totalorder %s73, %s74
      %p86 = scmp.eq.s32.totalorder %s22, 1
      %p87 = por %p85, %p86
      %p89 = scmp.ne.s32.totalorder %s74, %s88
      %p90 = scmp.eq.s32.totalorder %s22, 0
      %p91 = por %p89, %p90
      %s92 = ssub.s32 %s16, %s23
      %p93 = scmp.eq.s32.totalorder %s92, 0
      %s95 = sadd.s32 %s94, 1
      %s96 = scalar_select %p93, %s94, %s95
      %p99 = pneg %p93
      %p100 = scmp.eq.s32.totalorder %s16, 1
      %p101 = por %p99, %p100
      %p102 = scmp.ne.s32.totalorder %s94, %s97
      %p103 = scmp.eq.s32.totalorder %s16, 0
      %p104 = por %p102, %p103
      %p105 = scmp.ne.s32.totalorder %s94, %s97
      %p106 = scmp.eq.s32.totalorder %s21, 1
      %p107 = por %p105, %p106
      %p108 = scmp.ne.s32.totalorder %s97, %s98
      %p109 = scmp.eq.s32.totalorder %s21, 0
      %p110 = por %p108, %p109
      %p111 = scmp.ne.s32.totalorder %s97, %s98
      %p112 = scmp.eq.s32.totalorder %s22, 1
      %p113 = por %p111, %p112
      %p115 = scmp.ne.s32.totalorder %s98, %s114
      %p116 = scmp.eq.s32.totalorder %s22, 0
      %p117 = por %p115, %p116
      %p118 = scmp.le.s32.totalorder 1, %s16
      %p119 = scmp.lt.s32.totalorder %s16, 3
      %p120 = pnand %p118, %p119
      %p121 = pneg %p120
      // Predicated region
      $region9: #{tpu_custom_call.1} parent=5 // pred_check
        _
      $region10: #{tpu_custom_call.1} parent=5 // pred_check_branch
        %123 = sbr.rel (%p120) target = $region12
      $region11: #{tpu_custom_call.1} parent=5 // pred_region
        %s124 = ssub.s32 %s16, 1
        // Predicated region
        $region13: #{tpu_custom_call.1} parent=11 // pred_check
          %p125 = pneg %p63
        $region14: #{tpu_custom_call.1} parent=11 // pred_check_branch
          %127 = sbr.rel (%p125) target = $region16
        $region15: #{tpu_custom_call.1} parent=11 // pred_region
          %129 = vsyncadd [#allocation6], 0
          %s130 = sshll.u32 %s1, 4
          %s131 = int_to_ptr.hbm [resolvable:$true] %s130
          %s132 = sshll.u32 [#allocation5], 4
          %s133 = int_to_ptr.vmem [resolvable:$true] %s132
          %138 = dma.hbm_to_vmem [thread:$0]  %s131, 1536, %s133, [#allocation6], 64, 64, 4
        $region16: #{tpu_custom_call.1} parent=11 // pred_fallthru
          _
        // Predicated region
        $region17: #{tpu_custom_call.1} parent=11 // pred_check
          %p139 = pneg %p84
        $region18: #{tpu_custom_call.1} parent=11 // pred_check_branch
          %141 = sbr.rel (%p139) target = $region20
        $region19: #{tpu_custom_call.1} parent=11 // pred_region
          _
        $region20: #{tpu_custom_call.1} parent=11 // pred_fallthru
          _
      $region12: #{tpu_custom_call.1} parent=5 // pred_fallthru
        _
      %p142 = scmp.lt.s32.totalorder %s16, 2
      // Predicated region
      $region21: #{tpu_custom_call.1} parent=5 // pred_check
        %p143 = pneg %p142
      $region22: #{tpu_custom_call.1} parent=5 // pred_check_branch
        %145 = sbr.rel (%p143) target = $region24
      $region23: #{tpu_custom_call.1} parent=5 // pred_region
        // Predicated region
        $region25: #{tpu_custom_call.1} parent=23 // pred_check
          %p146 = pneg %p36
        $region26: #{tpu_custom_call.1} parent=23 // pred_check_branch
          %148 = sbr.rel (%p146) target = $region28
        $region27: #{tpu_custom_call.1} parent=23 // pred_region
          %s149 = sand.u32 %s26, 1
          %s150 = scalar_lea.sflag [#allocation3], %s149
          %s151 = sand.u32 %s26, 1
          %s152 = smul.addr %s151, 16
          %s153 = scalar_lea.vmem [#allocation2], %s152
          %155 = vsyncadd %s150, 0
          %s156 = smul.addr %s16, 4
          %s157 = smul.addr %s156, 4
          %s158 = scalar_lea.hbm %s0, %s157
          %s159 = sshll.u32 %s158, 4
          %s160 = int_to_ptr.hbm [resolvable:$true] %s159
          %s161 = sshll.u32 %s153, 4
          %s162 = int_to_ptr.vmem [resolvable:$true] %s161
          %167 = dma.hbm_to_vmem [thread:$0]  %s160, 256, %s162, %s150, 128, 128, 8
        $region28: #{tpu_custom_call.1} parent=23 // pred_fallthru
          _
      $region24: #{tpu_custom_call.1} parent=5 // pred_fallthru
        _
      %p168 = scmp.le.s32.totalorder 1, %s16
      %p169 = scmp.lt.s32.totalorder %s16, 3
      %p170 = pnand %p168, %p169
      %p171 = pneg %p170
      // Predicated region
      $region29: #{tpu_custom_call.1} parent=5 // pred_check
        _
      $region30: #{tpu_custom_call.1} parent=5 // pred_check_branch
        %173 = sbr.rel (%p170) target = $region32
      $region31: #{tpu_custom_call.1} parent=5 // pred_region
        %s174 = ssub.s32 %s16, 1
        %s175 = sand.u32 %s29, 1
        %s176 = scalar_lea.sflag [#allocation3], %s175
        %s177 = sand.u32 %s29, 1
        %s178 = smul.addr %s177, 16
        %s179 = scalar_lea.vmem [#allocation2], %s178
        // Predicated region
        $region33: #{tpu_custom_call.1} parent=31 // pred_check
          %p180 = pneg %p42
        $region34: #{tpu_custom_call.1} parent=31 // pred_check_branch
          %182 = sbr.rel (%p180) target = $region36
        $region35: #{tpu_custom_call.1} parent=31 // pred_region
          %184 = dma.done %s176, 256
        $region36: #{tpu_custom_call.1} parent=31 // pred_fallthru
          _
        // Predicated region
        $region37: #{tpu_custom_call.1} parent=31 // pred_check
          %p185 = pneg %p63
        $region38: #{tpu_custom_call.1} parent=31 // pred_check_branch
          %187 = sbr.rel (%p185) target = $region40
        $region39: #{tpu_custom_call.1} parent=31 // pred_region
          %189 = dma.done [#allocation6], 1536
        $region40: #{tpu_custom_call.1} parent=31 // pred_fallthru
          _
        %s190 = sand.u32 %s29, 1
        %s191 = scalar_lea.sflag [#allocation3], %s190
        %s192 = sand.u32 %s29, 1
        %s193 = smul.addr %s192, 16
        %s194 = scalar_lea.vmem [#allocation2], %s193
        %p195 = pneg %p42
        %p196 = pneg %p39
        %p197 = pneg %p63
        %p198 = pneg %p60
        %p199 = pneg %p84
        %p200 = pneg %p81
        %p201 = pneg %p110
        %p202 = pneg %p107
        %s203 = sand.u32 %s97, 1
        %s204 = scalar_lea.sflag [#allocation4], %s203
        %s205 = sand.u32 %s97, 1
        %s206 = smul.addr %s205, 16
        %s207 = scalar_lea.vmem [#allocation7], %s206
        %v209 = vld [vmem:[%s179] sm:$0xff]
        %v210 = vld [vmem:[%s179 + $0x8] sm:$0xff]
        %v211 = vld [vmem:[#allocation5] sm:$0xf]
        %v212 = vld [vmem:[#allocation5 + $0x4] sm:$0xf]
        %v213 = vld [vmem:[#allocation5 + $0x8] sm:$0xf]
        %v214 = vld [vmem:[#allocation5 + $0xc] sm:$0xf]
        %v215 = vld [vmem:[#allocation5 + $0x10] sm:$0xf]
        %v216 = vld [vmem:[#allocation5 + $0x14] sm:$0xf]
        %v217 = vld [vmem:[#allocation5 + $0x18] sm:$0xf]
        %v218 = vld [vmem:[#allocation5 + $0x1c] sm:$0xf]
        %v219 = vld [vmem:[#allocation5 + $0x20] sm:$0xf]
        %v220 = vld [vmem:[#allocation5 + $0x24] sm:$0xf]
        %v221 = vld [vmem:[#allocation5 + $0x28] sm:$0xf]
        %v222 = vld [vmem:[#allocation5 + $0x2c] sm:$0xf]
        %v223 = vld [vmem:[#allocation5 + $0x30] sm:$0xf]
        %v224 = vld [vmem:[#allocation5 + $0x34] sm:$0xf]
        %v225 = vld [vmem:[#allocation5 + $0x38] sm:$0xf]
        %v226 = vld [vmem:[#allocation5 + $0x3c] sm:$0xf]
        %v227 = vld [vmem:[#allocation5 + $0x40] sm:$0xf]
        %v228 = vld [vmem:[#allocation5 + $0x44] sm:$0xf]
        %v229 = vld [vmem:[#allocation5 + $0x48] sm:$0xf]
        %v230 = vld [vmem:[#allocation5 + $0x4c] sm:$0xf]
        %v231 = vld [vmem:[#allocation5 + $0x50] sm:$0xf]
        %v232 = vld [vmem:[#allocation5 + $0x54] sm:$0xf]
        %v233 = vld [vmem:[#allocation5 + $0x58] sm:$0xf]
        %v234 = vld [vmem:[#allocation5 + $0x5c] sm:$0xf]
        %v235 = vld [vmem:[%s2] sm:$0x1]
        %v237 = vperm.slane %v235, 0
        %v241 = vunpack.c.l.b16 %v209
        %v242 = vunpack.c.h.b16 %v209
        %v243 = vunpack.c.l.b16 %v210
        %v244 = vunpack.c.h.b16 %v210
        %v245 = vpack.c.b16 %v243, %v241
        %v246 = vpack.c.b16 %v244, %v242
        %v272 = vunpack.c.l.b16 %v211
        %v273 = vunpack.c.l.b16 %v212
        %v274 = vunpack.c.l.b16 %v213
        %v275 = vunpack.c.l.b16 %v214
        %v276 = vunpack.c.l.b16 %v215
        %v277 = vunpack.c.l.b16 %v216
        %v278 = vunpack.c.l.b16 %v217
        %v279 = vunpack.c.l.b16 %v218
        %v280 = vunpack.c.l.b16 %v219
        %v281 = vunpack.c.l.b16 %v220
        %v282 = vunpack.c.l.b16 %v221
        %v283 = vunpack.c.l.b16 %v222
        %v284 = vunpack.c.l.b16 %v223
        %v285 = vunpack.c.l.b16 %v224
        %v286 = vunpack.c.l.b16 %v225
        %v287 = vunpack.c.l.b16 %v226
        %v288 = vunpack.c.l.b16 %v227
        %v289 = vunpack.c.l.b16 %v228
        %v290 = vunpack.c.l.b16 %v229
        %v291 = vunpack.c.l.b16 %v230
        %v292 = vunpack.c.l.b16 %v231
        %v293 = vunpack.c.l.b16 %v232
        %v294 = vunpack.c.l.b16 %v233
        %v295 = vunpack.c.l.b16 %v234
        %v296 = vpack.c.b16 %v273, %v272
        %v297 = vpack.c.b16 %v275, %v274
        %v298 = vpack.c.b16 %v277, %v276
        %v299 = vpack.c.b16 %v279, %v278
        %v300 = vpack.c.b16 %v281, %v280
        %v301 = vpack.c.b16 %v283, %v282
        %v302 = vpack.c.b16 %v285, %v284
        %v303 = vpack.c.b16 %v287, %v286
        %v304 = vpack.c.b16 %v289, %v288
        %v305 = vpack.c.b16 %v291, %v290
        %v306 = vpack.c.b16 %v293, %v292
        %v307 = vpack.c.b16 %v295, %v294
        %vm320 = vcmask 523264
        %v322 = vsel %vm320, %v246, 0
        %324 = vmatpush.bf16.msra.mxu0 %v303
        %325 = vmatpush.bf16.msra.mxu0 %v302
        %326 = vmatpush.bf16.msra.mxu0 %v301
        %327 = vmatpush.bf16.msra.mxu0 %v300
        %328 = vmatpush.bf16.msra.mxu0 %v299
        %329 = vmatpush.bf16.msra.mxu0 %v298
        %330 = vmatpush.bf16.msra.mxu0 %v297
        %331 = vmatpush.bf16.msra.mxu0 %v296
        %332 = vmatmul.bf16.gmra.mxu0 %v245
        %v333 = vpop.f32.mrf.mxu0
        %v334 = vadd.f32 %v237, %v333
        %v335 = vpop.f32.mrf.mxu0
        %v336 = vadd.f32 %v237, %v335
        %337 = vdwg.mxu0
        %338 = vmatpush.bf16.msra.mxu0 0
        %339 = vmatpush.bf16.msra.mxu0 0
        %340 = vmatpush.bf16.msra.mxu0 0
        %341 = vmatpush.bf16.msra.mxu0 0
        %342 = vmatpush.bf16.msra.mxu0 %v307
        %343 = vmatpush.bf16.msra.mxu0 %v306
        %344 = vmatpush.bf16.msra.mxu0 %v305
        %345 = vmatpush.bf16.msra.mxu0 %v304
        %346 = vmatmul.bf16.gmra.mxu0 %v322
        %v347 = vpop.f32.mrf.mxu0
        %v348 = vadd.f32 %v334, %v347
        %v349 = vpop.f32.mrf.mxu0
        %v350 = vadd.f32 %v336, %v349
        %351 = vdwg.mxu0
        %v352 = vmax.f32 %v348, 0.0
        %v353 = vmax.f32 %v350, 0.0
        %354 = vst [vmem:[%s207] sm:$0xff] %v352
        %355 = vst [vmem:[%s207 + $0x8] sm:$0xff] %v353
        %s356 = sand.u32 %s97, 1
        %s357 = scalar_lea.sflag [#allocation4], %s356
        %s358 = sand.u32 %s97, 1
        %s359 = smul.addr %s358, 16
        %s360 = scalar_lea.vmem [#allocation7], %s359
        // Predicated region
        $region41: #{tpu_custom_call.1} parent=31 // pred_check
          %p361 = pneg %p107
        $region42: #{tpu_custom_call.1} parent=31 // pred_check_branch
          %363 = sbr.rel (%p361) target = $region44
        $region43: #{tpu_custom_call.1} parent=31 // pred_region
          %365 = vsyncadd %s357, 0
          %s366 = smul.addr %s21, 2
          %s367 = smul.addr %s366, 8
          %s368 = scalar_lea.hbm %s3, %s367
          %s369 = sshll.u32 %s360, 4
          %s370 = int_to_ptr.vmem [resolvable:$true] %s369
          %s371 = sshll.u32 %s368, 4
          %s372 = int_to_ptr.hbm [resolvable:$true] %s371
          %377 = dma.vmem_to_hbm [thread:$0]  %s370, 256, %s372, %s357, 128, 128, 8
        $region44: #{tpu_custom_call.1} parent=31 // pred_fallthru
          _
      $region32: #{tpu_custom_call.1} parent=5 // pred_fallthru
        _
      %p378 = scmp.le.s32.totalorder 2, %s16
      // Predicated region
      $region45: #{tpu_custom_call.1} parent=5 // pred_check
        %p379 = pneg %p378
      $region46: #{tpu_custom_call.1} parent=5 // pred_check_branch
        %381 = sbr.rel (%p379) target = $region48
      $region47: #{tpu_custom_call.1} parent=5 // pred_region
        %s382 = ssub.s32 %s16, 2
        // Predicated region
        $region49: #{tpu_custom_call.1} parent=47 // pred_check
          %p383 = pneg %p113
        $region50: #{tpu_custom_call.1} parent=47 // pred_check_branch
          %385 = sbr.rel (%p383) target = $region52
        $region51: #{tpu_custom_call.1} parent=47 // pred_region
          %s386 = sand.u32 %s98, 1
          %s387 = scalar_lea.sflag [#allocation4], %s386
          %s388 = sand.u32 %s98, 1
          %s389 = smul.addr %s388, 16
          %s390 = scalar_lea.vmem [#allocation7], %s389
          %392 = dma.done %s387, 256
        $region52: #{tpu_custom_call.1} parent=47 // pred_fallthru
          _
      $region48: #{tpu_custom_call.1} parent=5 // pred_fallthru
        _
    $region6: #{tpu_custom_call.1} parent=1 // loop_footer
      %s20 = sadd.s32 1, %s16
    $region7: #{tpu_custom_call.1} parent=1 // loop_footer_branch
      %15 = sbr.rel target = $region3
    $region8: #{tpu_custom_call.1} parent=1 // loop_exit
      _
    %393 = vsyncpa [#allocation3], 1
    %s394 = scalar_lea.sflag [#allocation3], 1
    %395 = vsyncpa %s394, 1
    %396 = vsyncpa [#allocation6], 1
    %397 = vsyncpa [#allocation4], 1
    %s398 = scalar_lea.sflag [#allocation4], 1
    %399 = vsyncpa %s398, 1

</llo_original>
